<compile_context>
chip_gen: v5e
topology: v5e:2x2
jax: 0.10.0
libtpu: 0.0.40
codegen_flags: <defaults>
</compile_context>

<pallas_src>
import functools

import jax
import jax.numpy as jnp
from jax.experimental import pallas as pl
from jax.experimental.pallas import tpu as pltpu

BN_EPS = 1e-5

# Budget for the double-buffered x tiles (2 buffers).  Kept <= ~24 MiB so the
# kernel fits comfortably inside v7x's 64 MiB VMEM per TensorCore and the
# default scoped limits on v5e/v6e.
_X_TILE_BUDGET_BYTES = 24 << 20
_MAX_THW = 2048      # 512-2048 lane-wide tiles reach ~85%+ of HBM roofline
_MIN_THW = 128


def _round_up(x, m):
    return (x + m - 1) // m * m


def _choose_c_blk(c):
    # C block is also the lane (last) dim of the pooled output block, so use a
    # multiple of 128 when possible; otherwise fall back to the full C.
    for blk in (256, 128):
        if c % blk == 0:
            return blk
    return c


def _choose_thw(hw, n, c_blk, itemsize):
    per_col = 2 * n * c_blk * itemsize            # double-buffered bytes / lane
    max_thw = max(_MIN_THW, (_X_TILE_BUDGET_BYTES // per_col) // 128 * 128)
    max_thw = min(max_thw, _MAX_THW)
    if hw <= max_thw:
        return _round_up(hw, _MIN_THW)
    return max_thw


# ---------------------------------------------------------------------------
# Stage 1: global average pooling (sum accumulation), streamed over HW.
# ---------------------------------------------------------------------------
def _pool_sum_kernel(x_ref, acc_ref):
    # acc_ref: (N, C_BLK) f32 output block, resident across the HW grid axis.
    @pl.when(pl.program_id(1) == 0)
    def _init():
        acc_ref[...] = jnp.zeros_like(acc_ref)

    # Lane-axis (HW) reduction with f32 accumulation; x streams in its native
    # dtype (bf16 inputs would halve HBM bytes).  Note for v5e: if profiling
    # shows the XLU lane-reduce binding before HBM, switch the streamed layout
    # to (N, THW, C) so the reduction becomes a sublane/VPU accumulation.
    acc_ref[...] += jnp.sum(x_ref[...], axis=-1, dtype=jnp.float32)


# ---------------------------------------------------------------------------
# Stage 2: tiny tail -- 1x1 conv (pre-transposed weight), BatchNorm (training
# mode batch statistics over N, biased variance, eps=1e-5), ReLU.
# ---------------------------------------------------------------------------
def _tail_kernel(pooled_ref, w_ref, gamma_ref, beta_ref, o_ref, *, inv_hw):
    # Finish the mean: one scalar multiply at finalize instead of per-tile.
    pooled = pooled_ref[...] * inv_hw                              # (N, C) f32

    # 1x1 conv, bias=False -> plain matmul on the MXU; weight was transposed
    # to (C, C_out) in the wrapper so no in-kernel relayout is needed.
    y = jnp.dot(pooled, w_ref[...], preferred_element_type=jnp.float32)

    # BatchNorm2d in training mode (fresh module): batch stats over N
    # (H = W = 1 after pooling).
    mu = jnp.mean(y, axis=0, keepdims=True)
    var = jnp.mean((y - mu) ** 2, axis=0, keepdims=True)
    y_hat = (y - mu) * jax.lax.rsqrt(var + BN_EPS)
    out = gamma_ref[...] * y_hat + beta_ref[...]

    # ReLU
    o_ref[...] = jnp.maximum(out, 0.0).astype(o_ref.dtype)


def pyramid_pool(x_nchw, conv_weight, gamma, beta):
    """x_nchw: (N, C, H, W); conv_weight: (C_out, C, 1, 1); gamma/beta: (C_out,).

    Returns (N, C_out, 1, 1), matching the PyTorch module's output shape.
    """
    N, C, H, W = x_nchw.shape
    C_out = conv_weight.shape[0]
    HW = H * W

    # ---- wrapper-side layout plumbing (one-time, cheap) -------------------
    x_flat = x_nchw.reshape(N, C, HW)

    c_blk = _choose_c_blk(C)
    thw = _choose_thw(HW, N, c_blk, x_flat.dtype.itemsize)
    hw_pad = _round_up(HW, thw)
    if hw_pad != HW:
        # Zero padding does not change the sum; the mean uses the true 1/HW.
        x_flat = jnp.pad(x_flat, ((0, 0), (0, 0), (0, hw_pad - HW)))

    w_t = conv_weight.reshape(C_out, C).T.astype(jnp.float32)      # (C, C_out)
    gamma2d = gamma.reshape(1, C_out).astype(jnp.float32)
    beta2d = beta.reshape(1, C_out).astype(jnp.float32)

    # ---- stage 1: streamed global sum over HW -----------------------------
    x_tile_bytes = N * c_blk * thw * x_flat.dtype.itemsize
    vmem_limit = int(min(max(2 * x_tile_bytes + (4 << 20), 16 << 20), 40 << 20))

    pooled_sum = pl.pallas_call(
        _pool_sum_kernel,
        out_shape=jax.ShapeDtypeStruct((N, C), jnp.float32),
        grid_spec=pltpu.PrefetchScalarGridSpec(
            num_scalar_prefetch=0,
            grid=(C // c_blk, hw_pad // thw),
            in_specs=[pl.BlockSpec((N, c_blk, thw), lambda c, k: (0, c, k))],
            out_specs=pl.BlockSpec((N, c_blk), lambda c, k: (0, c)),
        ),
        compiler_params=pltpu.CompilerParams(
            dimension_semantics=("parallel", "arbitrary"),
            vmem_limit_bytes=vmem_limit,
        ),
    )(x_flat)

    # ---- stage 2: tiny conv + BN + ReLU tail (negligible bytes/FLOPs) -----
    out = pl.pallas_call(
        functools.partial(_tail_kernel, inv_hw=1.0 / float(HW)),
        out_shape=jax.ShapeDtypeStruct((N, C_out), x_nchw.dtype),
        in_specs=[
            pl.BlockSpec((N, C), lambda: (0, 0)),
            pl.BlockSpec((C, C_out), lambda: (0, 0)),
            pl.BlockSpec((1, C_out), lambda: (0, 0)),
            pl.BlockSpec((1, C_out), lambda: (0, 0)),
        ],
        out_specs=pl.BlockSpec((N, C_out), lambda: (0, 0)),
    )(pooled_sum, w_t, gamma2d, beta2d)

    return out.reshape(N, C_out, 1, 1)


def _reference(x_nchw, conv_weight, gamma, beta):
    # Pure-JAX reference of the same forward pass (training-mode BN).
    N, C, H, W = x_nchw.shape
    C_out = conv_weight.shape[0]
    pooled = jnp.mean(x_nchw.astype(jnp.float32), axis=(2, 3))      # (N, C)
    y = pooled @ conv_weight.reshape(C_out, C).T                    # (N, C_out)
    mu = jnp.mean(y, axis=0, keepdims=True)
    var = jnp.mean((y - mu) ** 2, axis=0, keepdims=True)
    y_hat = (y - mu) * jax.lax.rsqrt(var + BN_EPS)
    out = jnp.maximum(gamma[None, :] * y_hat + beta[None, :], 0.0)
    return out.reshape(N, C_out, 1, 1)


if __name__ == "__main__":
    # Small shapes consistent with the module.
    N, C, H, W = 4, 32, 16, 16
    pool_size = 4
    C_out = C // pool_size

    key = jax.random.PRNGKey(0)
    kx, kw, kg, kb = jax.random.split(key, 4)

    x = jax.random.normal(kx, (N, C, H, W), dtype=jnp.float32)

    # Conv2d weight (C_out, C, 1, 1), no bias; BatchNorm affine gamma/beta.
    conv_weight = jax.random.normal(kw, (C_out, C, 1, 1), dtype=jnp.float32) * 0.1
    gamma = 1.0 + 0.05 * jax.random.normal(kg, (C_out,), dtype=jnp.float32)
    beta = 0.05 * jax.random.normal(kb, (C_out,), dtype=jnp.float32)

    y = pyramid_pool(x, conv_weight, gamma, beta)
    jax.block_until_ready(y)

    y_ref = _reference(x, conv_weight, gamma, beta)

    assert y.shape == (N, C_out, 1, 1)
    assert bool(jnp.all(y >= 0.0))                       # ReLU output
    assert bool(jnp.allclose(y, y_ref, atol=1e-5, rtol=1e-5))
    print("KERNEL_OK")
</pallas_src>

<mosaic_0001>
module attributes {stable_mosaic.version = 11 : i64} {
  func.func @_pool_sum_kernel(%arg0: i32, %arg1: i32, %arg2: memref<4x32x256xf32, #tpu.memory_space<vmem>>, %arg3: memref<4x32xf32, #tpu.memory_space<vmem>>) attributes {dimension_semantics = [#tpu.dimension_semantics<parallel>, #tpu.dimension_semantics<arbitrary>], iteration_bounds = array<i64: 1, 1>, scalar_prefetch = 0 : i64, scratch_operands = 0 : i64, tpu.core_type = #tpu.core_type<tc>, window_params = [{transform_indices = @transform_0, window_bounds = array<i64: 4, 32, 256>}, {transform_indices = @transform_1, window_bounds = array<i64: 4, 32>}]} {
    %c0_i32 = arith.constant 0 : i32
    %0 = arith.cmpi eq, %arg1, %c0_i32 : i32
    %1 = arith.extui %0 : i1 to i32
    %c0_i32_0 = arith.constant 0 : i32
    %2 = arith.cmpi ne, %1, %c0_i32_0 : i32
    scf.if %2 {
      %cst_7 = arith.constant 0.000000e+00 : f32
      %8 = vector.broadcast %cst_7 : f32 to vector<4x32xf32>
      %c0_8 = arith.constant 0 : index
      %c0_9 = arith.constant 0 : index
      %9 = vector.load %arg3[%c0_8, %c0_9] : memref<4x32xf32, #tpu.memory_space<vmem>>, vector<4x32xf32>
      tpu.vector_store %arg3[%c0_8, %c0_9], %8 {strides = array<i32>} : memref<4x32xf32, #tpu.memory_space<vmem>>, vector<4x32xf32>,
    } else {
    }
    %c0 = arith.constant 0 : index
    %c0_1 = arith.constant 0 : index
    %3 = vector.load %arg3[%c0, %c0_1] : memref<4x32xf32, #tpu.memory_space<vmem>>, vector<4x32xf32>
    %c0_2 = arith.constant 0 : index
    %c0_3 = arith.constant 0 : index
    %c0_4 = arith.constant 0 : index
    %4 = vector.load %arg2[%c0_2, %c0_3, %c0_4] : memref<4x32x256xf32, #tpu.memory_space<vmem>>, vector<4x32x256xf32>
    %cst = arith.constant dense<0.000000e+00> : vector<4x32xf32>
    %5 = vector.multi_reduction <add>, %4, %cst [2] : vector<4x32x256xf32> to vector<4x32xf32>
    %6 = arith.addf %3, %5 : vector<4x32xf32>
    %c0_5 = arith.constant 0 : index
    %c0_6 = arith.constant 0 : index
    %7 = vector.load %arg3[%c0_5, %c0_6] : memref<4x32xf32, #tpu.memory_space<vmem>>, vector<4x32xf32>
    tpu.vector_store %arg3[%c0_5, %c0_6], %6 {strides = array<i32>} : memref<4x32xf32, #tpu.memory_space<vmem>>, vector<4x32xf32>,
    return
  }
  func.func @transform_0(%arg0: i32, %arg1: i32) -> (i32, i32, i32) {
    %c0_i32 = arith.constant 0 : i32
    %c0_i32_0 = arith.constant 0 : i32
    return %c0_i32, %arg0, %arg1 : i32, i32, i32
  }
  func.func @transform_1(%arg0: i32, %arg1: i32) -> (i32, i32) {
    %c0_i32 = arith.constant 0 : i32
    %c0_i32_0 = arith.constant 0 : i32
    return %c0_i32, %arg0 : i32, i32
  }
}

</mosaic_0001>

<llo_original>
// kernel: tpu_custom_call.1
$region0: #{tpu_custom_call.1}
  #allocation0 [shape = 'u32[]', space=smem, size = 0x4, offset = 0x4, fixed_abs, tag = 'smem constant byte address 0x4 - core index']
  #allocation1 [shape = 'u32[72,128]{1,0:T(1,128)}', space=vmem, size = 0x9000, scoped, tag = 'internal scratch']
  %s0 = inlined_call_operand.hbm [shape: f32[4,32,256], index: 0, kind: input, shape index: {}]
  %s1 = inlined_call_operand.hbm [shape: f32[4,32], index: 1, kind: output, shape index: {}]
  %s2 = sld [smem:[#allocation0]]
  $region22: #{tpu_custom_call.1} parent=0
    _
  %s4 = ssub.s32 1, %s2
  %s5 = scalar_select 0, %s4, %s2
  $region1: #{tpu_custom_call.1} parent=0
    #allocation2 [shape = 'u8[131072]{0}', space=vmem, size = 0x20000, scoped, tag = 'input window, operand 0, single buffered']
    #allocation3 [shape = 's32[1]{0}', space=sflag, size = 0x4, scoped, tag = 'scoped memory for tpu_custom_call.1']
    #allocation4 [shape = 's32[1]{0}', space=sflag, size = 0x4, scoped, tag = 'scoped memory for tpu_custom_call.1']
    #allocation5 [shape = 'u8[2048]{0}', space=vmem, size = 0x800, scoped, tag = 'output window, operand 0, single buffered']
    %6 = vsyncpa [#allocation3], 0
    %7 = vsyncpa [#allocation4], 0
    // Predicated region
    $region2: #{tpu_custom_call.1} parent=1 // pred_check
      _
    $region3: #{tpu_custom_call.1} parent=1 // pred_check_branch
      %9 = sbr.rel (0) target = $region5
    $region4: #{tpu_custom_call.1} parent=1 // pred_region
      %11 = vsyncadd [#allocation3], 0
      %s12 = sshll.u32 %s0, 4
      %s13 = int_to_ptr.hbm [resolvable:$true] %s12
      %s14 = sshll.u32 [#allocation2], 4
      %s15 = int_to_ptr.vmem [resolvable:$true] %s14
      %20 = dma.hbm_to_vmem [thread:$0]  %s13, 4096, %s15, [#allocation3], 256, 256, 16
    $region5: #{tpu_custom_call.1} parent=1 // pred_fallthru
      _
    // Predicated region
    $region6: #{tpu_custom_call.1} parent=1 // pred_check
      _
    $region7: #{tpu_custom_call.1} parent=1 // pred_check_branch
      %22 = sbr.rel (0) target = $region9
    $region8: #{tpu_custom_call.1} parent=1 // pred_region
      %24 = dma.done [#allocation3], 4096
    $region9: #{tpu_custom_call.1} parent=1 // pred_fallthru
      _
    %p25 = scmp.eq.s32.totalorder 0, 0
    // Predicated region
    $region10: #{tpu_custom_call.1} parent=1 // pred_check
      %p26 = pneg %p25
    $region11: #{tpu_custom_call.1} parent=1 // pred_check_branch
      %28 = sbr.rel (%p26) target = $region13
    $region12: #{tpu_custom_call.1} parent=1 // pred_region
      %vm29 = vcmask 257024
      %30 = vst.msk [vmem:[#allocation5] sm:$0xf] %vm29, 0.0
    $region13: #{tpu_custom_call.1} parent=1 // pred_fallthru
      _
    %v31 = vld [vmem:[#allocation5] sm:$0xf]
    %v32 = vld [vmem:[#allocation2] sm:$0xff]
    %v33 = vld [vmem:[#allocation2 + $0x8] sm:$0xff]
    %v34 = vld [vmem:[#allocation2 + $0x10] sm:$0xff]
    %v35 = vld [vmem:[#allocation2 + $0x18] sm:$0xff]
    %v36 = vld [vmem:[#allocation2 + $0x20] sm:$0xff]
    %v37 = vld [vmem:[#allocation2 + $0x28] sm:$0xff]
    %v38 = vld [vmem:[#allocation2 + $0x30] sm:$0xff]
    %v39 = vld [vmem:[#allocation2 + $0x38] sm:$0xff]
    %v40 = vld [vmem:[#allocation2 + $0x40] sm:$0xff]
    %v41 = vld [vmem:[#allocation2 + $0x48] sm:$0xff]
    %v42 = vld [vmem:[#allocation2 + $0x50] sm:$0xff]
    %v43 = vld [vmem:[#allocation2 + $0x58] sm:$0xff]
    %v44 = vld [vmem:[#allocation2 + $0x60] sm:$0xff]
    %v45 = vld [vmem:[#allocation2 + $0x68] sm:$0xff]
    %v46 = vld [vmem:[#allocation2 + $0x70] sm:$0xff]
    %v47 = vld [vmem:[#allocation2 + $0x78] sm:$0xff]
    %v48 = vld [vmem:[#allocation2 + $0x80] sm:$0xff]
    %v49 = vld [vmem:[#allocation2 + $0x88] sm:$0xff]
    %v50 = vld [vmem:[#allocation2 + $0x90] sm:$0xff]
    %v51 = vld [vmem:[#allocation2 + $0x98] sm:$0xff]
    %v52 = vld [vmem:[#allocation2 + $0xa0] sm:$0xff]
    %v53 = vld [vmem:[#allocation2 + $0xa8] sm:$0xff]
    %v54 = vld [vmem:[#allocation2 + $0xb0] sm:$0xff]
    %v55 = vld [vmem:[#allocation2 + $0xb8] sm:$0xff]
    %v56 = vld [vmem:[#allocation2 + $0xc0] sm:$0xff]
    %v57 = vld [vmem:[#allocation2 + $0xc8] sm:$0xff]
    %v58 = vld [vmem:[#allocation2 + $0xd0] sm:$0xff]
    %v59 = vld [vmem:[#allocation2 + $0xd8] sm:$0xff]
    %v60 = vld [vmem:[#allocation2 + $0xe0] sm:$0xff]
    %v61 = vld [vmem:[#allocation2 + $0xe8] sm:$0xff]
    %v62 = vld [vmem:[#allocation2 + $0xf0] sm:$0xff]
    %v63 = vld [vmem:[#allocation2 + $0xf8] sm:$0xff]
    %v64 = vadd.f32 %v32, %v33
    %65 = vadd.xlane.f32.xlu0 %v64
    %v66 = vpop.xlane.xlu0 %65
    %v67 = vadd.f32 %v34, %v35
    %68 = vadd.xlane.f32.xlu0 %v67
    %v69 = vpop.xlane.xlu0 %68
    %v70 = vadd.f32 %v36, %v37
    %71 = vadd.xlane.f32.xlu0 %v70
    %v72 = vpop.xlane.xlu0 %71
    %v73 = vadd.f32 %v38, %v39
    %74 = vadd.xlane.f32.xlu0 %v73
    %v75 = vpop.xlane.xlu0 %74
    %v76 = vadd.f32 %v40, %v41
    %77 = vadd.xlane.f32.xlu0 %v76
    %v78 = vpop.xlane.xlu0 %77
    %v79 = vadd.f32 %v42, %v43
    %80 = vadd.xlane.f32.xlu0 %v79
    %v81 = vpop.xlane.xlu0 %80
    %v82 = vadd.f32 %v44, %v45
    %83 = vadd.xlane.f32.xlu0 %v82
    %v84 = vpop.xlane.xlu0 %83
    %v85 = vadd.f32 %v46, %v47
    %86 = vadd.xlane.f32.xlu0 %v85
    %v87 = vpop.xlane.xlu0 %86
    %v88 = vadd.f32 %v48, %v49
    %89 = vadd.xlane.f32.xlu0 %v88
    %v90 = vpop.xlane.xlu0 %89
    %v91 = vadd.f32 %v50, %v51
    %92 = vadd.xlane.f32.xlu0 %v91
    %v93 = vpop.xlane.xlu0 %92
    %v94 = vadd.f32 %v52, %v53
    %95 = vadd.xlane.f32.xlu0 %v94
    %v96 = vpop.xlane.xlu0 %95
    %v97 = vadd.f32 %v54, %v55
    %98 = vadd.xlane.f32.xlu0 %v97
    %v99 = vpop.xlane.xlu0 %98
    %v100 = vadd.f32 %v56, %v57
    %101 = vadd.xlane.f32.xlu0 %v100
    %v102 = vpop.xlane.xlu0 %101
    %v103 = vadd.f32 %v58, %v59
    %104 = vadd.xlane.f32.xlu0 %v103
    %v105 = vpop.xlane.xlu0 %104
    %v106 = vadd.f32 %v60, %v61
    %107 = vadd.xlane.f32.xlu0 %v106
    %v108 = vpop.xlane.xlu0 %107
    %v109 = vadd.f32 %v62, %v63
    %110 = vadd.xlane.f32.xlu0 %v109
    %v111 = vpop.xlane.xlu0 %110
    %v128 = vlaneseq
    %v129 = vand.u32 %v128, 127
    %v130 = vperm.slane %v66, %v129
    %v131 = vadd.s32 %v129, 4294967288
    %v132 = vperm.slane %v69, %v131
    %vm133 = vcmask 130112
    %v134 = vsel %vm133, %v132, %v130
    %v135 = vadd.s32 %v129, 4294967280
    %v136 = vperm.slane %v72, %v135
    %vm137 = vcmask 195712
    %v138 = vsel %vm137, %v136, %v134
    %v139 = vadd.s32 %v129, 4294967272
    %v140 = vperm.slane %v75, %v139
    %vm141 = vcmask 261312
    %v142 = vsel %vm141, %v140, %v138
    %v143 = vperm.slane %v78, %v129
    %v144 = vperm.slane %v81, %v131
    %v145 = vsel %vm133, %v144, %v143
    %v146 = vperm.slane %v84, %v135
    %v147 = vsel %vm137, %v146, %v145
    %v148 = vperm.slane %v87, %v139
    %v149 = vsel %vm141, %v148, %v147
    %v150 = vperm.slane %v90, %v129
    %v151 = vperm.slane %v93, %v131
    %v152 = vsel %vm133, %v151, %v150
    %v153 = vperm.slane %v96, %v135
    %v154 = vsel %vm137, %v153, %v152
    %v155 = vperm.slane %v99, %v139
    %v156 = vsel %vm141, %v155, %v154
    %v157 = vperm.slane %v102, %v129
    %v158 = vperm.slane %v105, %v131
    %v159 = vsel %vm133, %v158, %v157
    %v160 = vperm.slane %v108, %v135
    %v161 = vsel %vm137, %v160, %v159
    %v162 = vperm.slane %v111, %v139
    %v163 = vsel %vm141, %v162, %v161
    %vm164 = vcmask 1041409
    %v165 = vsel %vm164, %v149, %v142
    %vm166 = vcmask 1042434
    %v167 = vsel %vm166, %v156, %v165
    %vm168 = vcmask 1043459
    %v169 = vsel %vm168, %v163, %v167
    %v171 = vadd.f32 %v31, %v169
    %vm172 = vcmask 257024
    %173 = vst.msk [vmem:[#allocation5] sm:$0xf] %vm172, %v171
    // Predicated region
    $region14: #{tpu_custom_call.1} parent=1 // pred_check
      _
    $region15: #{tpu_custom_call.1} parent=1 // pred_check_branch
      %175 = sbr.rel (0) target = $region17
    $region16: #{tpu_custom_call.1} parent=1 // pred_region
      %177 = vsyncadd [#allocation4], 0
      %s179 = sshll.u32 [#allocation5], 4
      %s180 = int_to_ptr.vmem [resolvable:$true] %s179
      %s181 = sshll.u32 %s1, 4
      %s182 = int_to_ptr.hbm [resolvable:$true] %s181
      %184 = dma.vmem_to_hbm [thread:$0]  %s180, 64, %s182, [#allocation4]
    $region17: #{tpu_custom_call.1} parent=1 // pred_fallthru
      _
    // Predicated region
    $region18: #{tpu_custom_call.1} parent=1 // pred_check
      _
    $region19: #{tpu_custom_call.1} parent=1 // pred_check_branch
      %186 = sbr.rel (0) target = $region21
    $region20: #{tpu_custom_call.1} parent=1 // pred_region
      %188 = dma.done [#allocation4], 64
    $region21: #{tpu_custom_call.1} parent=1 // pred_fallthru
      _
    %189 = vsyncpa [#allocation3], 1
    %190 = vsyncpa [#allocation4], 1

</llo_original>
